<compile_context>
chip_gen: v7x
topology: tpu7x:2x2x1
jax: 0.10.0
libtpu: 0.0.40
codegen_flags: <defaults>
</compile_context>

<pallas_src>
import jax
import jax.numpy as jnp
from jax import lax
from jax.experimental import pallas as pl
from jax.experimental.pallas import tpu as pltpu

_LANE = 128                       # TPU lane width
_MAX_BATCH_TILE = 16384           # rows of x per grid step (F=32 -> 2 MiB per buffer)
_VMEM_BYTES_PER_X_BUF = 4 * 1024 * 1024   # cap per x tile so v5e double-buffering fits
_SMALL_BATCH_FALLBACK = 1024      # below this, plain XLA matvec beats kernel launch cost


def _round_up(x, m):
    return -(-x // m) * m


def _linear_kernel(w_ref, b_ref, x_ref, o_ref):
    # w_ref : (1, F)   VMEM, resident across the grid (index_map -> (0, 0))
    # b_ref : (1, 1)   SMEM scalar bias
    # x_ref : (tb, F)  VMEM batch tile of x in its natural layout
    # o_ref : (1, tb)  lane-dense output tile (batch on the lane axis)
    acc = lax.dot_general(
        w_ref[...], x_ref[...],
        dimension_numbers=(((1,), (1,)), ((), ())),   # contract F of both -> (1, tb)
        preferred_element_type=jnp.float32,
    )
    o_ref[...] = (acc + b_ref[0, 0]).astype(o_ref.dtype)


def subnet_forward(x, weight, bias):
    """Pallas implementation of subNet.forward.

    x:      (B, num_peak, num_tf) float32
    weight: (1, num_peak*num_tf)  float32   (PyTorch nn.Linear layout: (out, in))
    bias:   (1,)                  float32
    returns (B, 1) float32
    """
    b_dim = x.shape[0]
    x_flat = x.reshape(b_dim, -1).astype(jnp.float32)   # glue reshape in plain JAX
    feat = x_flat.shape[1]

    w_row = weight.reshape(1, feat).astype(jnp.float32)
    b_vec = bias.reshape(-1).astype(jnp.float32)

    # Tiny batches: pallas_call launch/pipeline prologue dominates -> fused XLA matvec.
    if b_dim < _SMALL_BATCH_FALLBACK:
        return x_flat @ w_row.T + b_vec

    b_2d = b_vec.reshape(1, 1)                           # scalar bias for SMEM

    # Batch tile: lane-aligned, big enough to amortize grid-step overhead, small enough
    # for v5e's scoped VMEM with double buffering, and capped so grid >= 2 steps (v7x
    # gets both TensorCores streaming on the "parallel" batch axis).
    b_round = _round_up(b_dim, _LANE)
    half_cap = _round_up(pl.cdiv(b_dim, 2), _LANE)
    vmem_cap = max(_LANE, (_VMEM_BYTES_PER_X_BUF // (feat * 4)) // _LANE * _LANE)
    tb = max(_LANE, min(b_round, _MAX_BATCH_TILE, half_cap, vmem_cap))

    grid = (pl.cdiv(b_dim, tb),)                         # ragged last tile, no jnp.pad

    out_t = pl.pallas_call(
        _linear_kernel,
        out_shape=jax.ShapeDtypeStruct((1, b_dim), jnp.float32),
        grid=grid,
        in_specs=[
            pl.BlockSpec((1, feat), lambda i: (0, 0)),            # weight, resident
            pl.BlockSpec(memory_space=pltpu.MemorySpace.SMEM),    # scalar bias
            pl.BlockSpec((tb, feat), lambda i: (i, 0)),           # natural-layout x tile
        ],
        out_specs=pl.BlockSpec((1, tb), lambda i: (0, i)),
        compiler_params=pltpu.CompilerParams(
            dimension_semantics=("parallel",),     # shard batch tiles across TCs (v7x)
            vmem_limit_bytes=32 * 1024 * 1024,     # explicit headroom (fits v5e/v6e/v7x)
        ),
    )(w_row, b_2d, x_flat)

    # Restore the module's (B, 1) output shape.
    return out_t.reshape(b_dim, 1)


def reference_forward(x, weight, bias):
    """Pure-JAX reference of the PyTorch forward."""
    b_dim = x.shape[0]
    x_flat = x.reshape(b_dim, -1)
    return x_flat @ weight.T + bias


if __name__ == "__main__":
    # Shapes consistent with the module: num_peak=4, num_tf=8 -> in_features=32
    num_peak, num_tf = 4, 8
    in_features = num_peak * num_tf

    key = jax.random.PRNGKey(0)
    kx1, kx2, kw, kb = jax.random.split(key, 4)

    # Deterministic parameter init (mimics nn.Linear's uniform(-1/sqrt(fan_in), ...))
    bound = 1.0 / (in_features ** 0.5)
    weight = jax.random.uniform(kw, (1, in_features), jnp.float32, -bound, bound)
    bias = jax.random.uniform(kb, (1,), jnp.float32, -bound, bound)

    # 1) Small batch (module's typical case) -> plain-JAX fallback path.
    x_small = jax.random.normal(kx1, (2, num_peak, num_tf), jnp.float32)
    out_small = jax.block_until_ready(subnet_forward(x_small, weight, bias))
    ref_small = reference_forward(x_small, weight, bias)
    assert out_small.shape == (2, 1), out_small.shape
    assert jnp.allclose(out_small, ref_small, atol=1e-5, rtol=1e-5)

    # 2) Larger, non-128-multiple batch -> exercises the Pallas kernel incl. ragged tile.
    batch = 2500
    x_big = jax.random.normal(kx2, (batch, num_peak, num_tf), jnp.float32)
    out_big = jax.block_until_ready(subnet_forward(x_big, weight, bias))
    ref_big = reference_forward(x_big, weight, bias)
    assert out_big.shape == (batch, 1), out_big.shape
    assert jnp.allclose(out_big, ref_big, atol=1e-5, rtol=1e-5), (
        jnp.max(jnp.abs(out_big - ref_big)))

    print("KERNEL_OK")
</pallas_src>

<mosaic_0001>
module attributes {stable_mosaic.version = 11 : i64} {
  func.func @_linear_kernel(%arg0: i32, %arg1: memref<1x32xf32, #tpu.memory_space<vmem>>, %arg2: memref<1x1xf32, #tpu.memory_space<smem>>, %arg3: memref<1280x32xf32, #tpu.memory_space<vmem>>, %arg4: memref<1x1280xf32, #tpu.memory_space<vmem>>) attributes {dimension_semantics = [#tpu.dimension_semantics<parallel>], iteration_bounds = array<i64: 2>, scalar_prefetch = 0 : i64, scratch_operands = 0 : i64, tpu.core_type = #tpu.core_type<tc>, window_params = [{pipeline_mode = #tpu.pipeline_mode<synchronous>, transform_indices = @transform_0, window_bounds = array<i64: 1, 32>}, {transform_indices = @transform_1, window_bounds = array<i64: 1, 1>}, {transform_indices = @transform_2, window_bounds = array<i64: 1280, 32>}, {transform_indices = @transform_3, window_bounds = array<i64: 1, 1280>}]} {
    %c0 = arith.constant 0 : index
    %c0_0 = arith.constant 0 : index
    %0 = vector.load %arg1[%c0, %c0_0] : memref<1x32xf32, #tpu.memory_space<vmem>>, vector<1x32xf32>
    %c0_1 = arith.constant 0 : index
    %c0_2 = arith.constant 0 : index
    %1 = vector.load %arg3[%c0_1, %c0_2] : memref<1280x32xf32, #tpu.memory_space<vmem>>, vector<1280x32xf32>
    %cst = arith.constant dense<0.000000e+00> : vector<1x1280xf32>
    %2 = tpu.matmul %0, %1, %cst {dimension_numbers = #tpu.dot_dimension_numbers<[1], [1], [0], [0], [0, 0, 1, 0], [], []>} : vector<1x32xf32>, vector<1280x32xf32>, vector<1x1280xf32> -> vector<1x1280xf32>
    %c0_3 = arith.constant 0 : index
    %c0_4 = arith.constant 0 : index
    %3 = memref.load %arg2[%c0_3, %c0_4] : memref<1x1xf32, #tpu.memory_space<smem>>
    %4 = vector.broadcast %3 : f32 to vector<1x1280xf32>
    %5 = arith.addf %2, %4 : vector<1x1280xf32>
    %c0_5 = arith.constant 0 : index
    %c0_6 = arith.constant 0 : index
    %6 = vector.load %arg4[%c0_5, %c0_6] : memref<1x1280xf32, #tpu.memory_space<vmem>>, vector<1x1280xf32>
    tpu.vector_store %arg4[%c0_5, %c0_6], %5 {strides = array<i32>} : memref<1x1280xf32, #tpu.memory_space<vmem>>, vector<1x1280xf32>,
    return
  }
  func.func @transform_0(%arg0: i32) -> (i32, i32) {
    %c0_i32 = arith.constant 0 : i32
    %c0_i32_0 = arith.constant 0 : i32
    %c0_i32_1 = arith.constant 0 : i32
    return %c0_i32, %c0_i32_0 : i32, i32
  }
  func.func @transform_1(%arg0: i32) -> (i32, i32) {
    %c0_i32 = arith.constant 0 : i32
    %c0_i32_0 = arith.constant 0 : i32
    %c0_i32_1 = arith.constant 0 : i32
    return %c0_i32, %c0_i32_0 : i32, i32
  }
  func.func @transform_2(%arg0: i32) -> (i32, i32) {
    %c0_i32 = arith.constant 0 : i32
    %c0_i32_0 = arith.constant 0 : i32
    return %arg0, %c0_i32 : i32, i32
  }
  func.func @transform_3(%arg0: i32) -> (i32, i32) {
    %c0_i32 = arith.constant 0 : i32
    %c0_i32_0 = arith.constant 0 : i32
    return %c0_i32, %arg0 : i32, i32
  }
}

</mosaic_0001>

<llo_original>
// kernel: tpu_custom_call.1
$region0: #{tpu_custom_call.1}
  #allocation0 [shape = 'u32[]', space=smem, size = 0x4, offset = 0x4, fixed_abs, tag = 'smem constant byte address 0x4 - core index']
  #allocation1 [shape = 'u32[144,128]{1,0:T(1,128)}', space=vmem, size = 0x12000, scoped, tag = 'internal scratch']
  #allocation2 [shape = 'f32[1,1]{1,0:T(1,128)S(6)}', space=smem, size = 0x200, scoped, tag = 'scoped memory for tpu_custom_call.1']
  %s0 = inlined_call_operand.vmem [shape: f32[1,32], index: 0, kind: input, shape index: {}]
  %s1 = inlined_call_operand.<no memory space> [shape: f32[1,1], index: 1, kind: input, shape index: {}]
  %s2 = inlined_call_operand.vmem [shape: f32[2500,32], index: 2, kind: input, shape index: {}]
  %s3 = inlined_call_operand.hbm [shape: f32[1,2500], index: 3, kind: output, shape index: {}]
  %s4 = sld [smem:[#allocation0]]
  $region45: #{tpu_custom_call.1} parent=0
    _
  %s6 = ssub.s32 1, %s4
  %s7 = scalar_select 0, %s6, %s4
  %8 = sst [smem:[#allocation2]] %s1
  $region1: #{tpu_custom_call.1} parent=0
    #allocation3 [shape = 'u8[10240]{0}', space=vmem, size = 0x2800, scoped, tag = 'output window, operand 0']
    #allocation4 [shape = 's32[2]{0}', space=sflag, size = 0x8, scoped, tag = 'scoped memory for tpu_custom_call.1']
    %9 = vsyncpa [#allocation4], 0
    %s10 = scalar_lea.sflag [#allocation4], 1
    %11 = vsyncpa %s10, 0
    loop: start=0, step=1, limit=4
    $region2: #{tpu_custom_call.1} parent=1 // loop_pre_header
      _
    $region3: #{tpu_custom_call.1} parent=1 // loop_header
      %s13 = sphi 0, %s17
      %p14 = scmp.ge.s32.totalorder %s13, 4
      %s21 = sphi 0, %s21
      %s23 = sphi 0, %s21
      %s24 = sphi 0, %s23
      %s38 = sphi 0, %s24
      %s42 = sphi 0, %s42
      %s44 = sphi 0, %s42
      %s45 = sphi 0, %s44
      %s59 = sphi 0, %s45
      %s65 = sphi 0, %s67
      %s68 = sphi 0, %s65
      %s69 = sphi 0, %s68
      %s85 = sphi 0, %s69
      %s91 = sphi 0, %s93
      %s94 = sphi 0, %s91
      %s95 = sphi 0, %s94
      %s111 = sphi 0, %s95
    $region4: #{tpu_custom_call.1} parent=1 // loop_header_branch
      %16 = sbr.rel (%p14) target = $region8
    $region5: #{tpu_custom_call.1} parent=1 // loop_body
      %s18 = ssub.s32 %s13, 1
      %s19 = ssub.s32 %s13, 2
      %s20 = sadd.s32 %s13, 1
      %s22 = sadd.s32 %s21, 1
      %p25 = scmp.eq.s32.totalorder %s13, 1
      %p26 = scmp.ne.s32.totalorder %s21, %s23
      %p27 = scmp.eq.s32.totalorder %s13, 0
      %p28 = por %p26, %p27
      %p29 = scmp.ne.s32.totalorder %s21, %s23
      %p30 = scmp.eq.s32.totalorder %s18, 1
      %p31 = por %p29, %p30
      %p32 = scmp.ne.s32.totalorder %s23, %s24
      %p33 = scmp.eq.s32.totalorder %s18, 0
      %p34 = por %p32, %p33
      %p35 = scmp.ne.s32.totalorder %s23, %s24
      %p36 = scmp.eq.s32.totalorder %s19, 1
      %p37 = por %p35, %p36
      %p39 = scmp.ne.s32.totalorder %s24, %s38
      %p40 = scmp.eq.s32.totalorder %s19, 0
      %p41 = por %p39, %p40
      %s43 = sadd.s32 %s42, 1
      %p46 = scmp.eq.s32.totalorder %s13, 1
      %p47 = scmp.ne.s32.totalorder %s42, %s44
      %p48 = scmp.eq.s32.totalorder %s13, 0
      %p49 = por %p47, %p48
      %p50 = scmp.ne.s32.totalorder %s42, %s44
      %p51 = scmp.eq.s32.totalorder %s18, 1
      %p52 = por %p50, %p51
      %p53 = scmp.ne.s32.totalorder %s44, %s45
      %p54 = scmp.eq.s32.totalorder %s18, 0
      %p55 = por %p53, %p54
      %p56 = scmp.ne.s32.totalorder %s44, %s45
      %p57 = scmp.eq.s32.totalorder %s19, 1
      %p58 = por %p56, %p57
      %p60 = scmp.ne.s32.totalorder %s45, %s59
      %p61 = scmp.eq.s32.totalorder %s19, 0
      %p62 = por %p60, %p61
      %s63 = ssub.s32 %s13, %s20
      %p64 = scmp.eq.s32.totalorder %s63, 0
      %s66 = sadd.s32 %s65, 1
      %s67 = scalar_select %p64, %s65, %s66
      %p70 = pneg %p64
      %p71 = scmp.eq.s32.totalorder %s13, 1
      %p72 = por %p70, %p71
      %p73 = scmp.ne.s32.totalorder %s65, %s68
      %p74 = scmp.eq.s32.totalorder %s13, 0
      %p75 = por %p73, %p74
      %p76 = scmp.ne.s32.totalorder %s65, %s68
      %p77 = scmp.eq.s32.totalorder %s18, 1
      %p78 = por %p76, %p77
      %p79 = scmp.ne.s32.totalorder %s68, %s69
      %p80 = scmp.eq.s32.totalorder %s18, 0
      %p81 = por %p79, %p80
      %p82 = scmp.ne.s32.totalorder %s68, %s69
      %p83 = scmp.eq.s32.totalorder %s19, 1
      %p84 = por %p82, %p83
      %p86 = scmp.ne.s32.totalorder %s69, %s85
      %p87 = scmp.eq.s32.totalorder %s19, 0
      %p88 = por %p86, %p87
      %s89 = ssub.s32 %s13, %s20
      %p90 = scmp.eq.s32.totalorder %s89, 0
      %s92 = sadd.s32 %s91, 1
      %s93 = scalar_select %p90, %s91, %s92
      %p96 = pneg %p90
      %p97 = scmp.eq.s32.totalorder %s13, 1
      %p98 = por %p96, %p97
      %p99 = scmp.ne.s32.totalorder %s91, %s94
      %p100 = scmp.eq.s32.totalorder %s13, 0
      %p101 = por %p99, %p100
      %p102 = scmp.ne.s32.totalorder %s91, %s94
      %p103 = scmp.eq.s32.totalorder %s18, 1
      %p104 = por %p102, %p103
      %p105 = scmp.ne.s32.totalorder %s94, %s95
      %p106 = scmp.eq.s32.totalorder %s18, 0
      %p107 = por %p105, %p106
      %p108 = scmp.ne.s32.totalorder %s94, %s95
      %p109 = scmp.eq.s32.totalorder %s19, 1
      %p110 = por %p108, %p109
      %p112 = scmp.ne.s32.totalorder %s95, %s111
      %p113 = scmp.eq.s32.totalorder %s19, 0
      %p114 = por %p112, %p113
      %p115 = scmp.le.s32.totalorder 1, %s13
      %p116 = scmp.lt.s32.totalorder %s13, 3
      %p117 = pnand %p115, %p116
      %p118 = pneg %p117
      // Predicated region
      $region9: #{tpu_custom_call.1} parent=5 // pred_check
        _
      $region10: #{tpu_custom_call.1} parent=5 // pred_check_branch
        %120 = sbr.rel (%p117) target = $region12
      $region11: #{tpu_custom_call.1} parent=5 // pred_region
        %s121 = ssub.s32 %s13, 1
        // Predicated region
        $region13: #{tpu_custom_call.1} parent=11 // pred_check
          %p122 = pneg %p34
        $region14: #{tpu_custom_call.1} parent=11 // pred_check_branch
          %124 = sbr.rel (%p122) target = $region16
        $region15: #{tpu_custom_call.1} parent=11 // pred_region
          _
        $region16: #{tpu_custom_call.1} parent=11 // pred_fallthru
          _
        // Predicated region
        $region17: #{tpu_custom_call.1} parent=11 // pred_check
          %p125 = pneg %p55
        $region18: #{tpu_custom_call.1} parent=11 // pred_check_branch
          %127 = sbr.rel (%p125) target = $region20
        $region19: #{tpu_custom_call.1} parent=11 // pred_region
          _
        $region20: #{tpu_custom_call.1} parent=11 // pred_fallthru
          _
      $region12: #{tpu_custom_call.1} parent=5 // pred_fallthru
        _
      %p128 = scmp.lt.s32.totalorder %s13, 2
      // Predicated region
      $region21: #{tpu_custom_call.1} parent=5 // pred_check
        %p129 = pneg %p128
      $region22: #{tpu_custom_call.1} parent=5 // pred_check_branch
        %131 = sbr.rel (%p129) target = $region24
      $region23: #{tpu_custom_call.1} parent=5 // pred_region
        // Predicated region
        $region25: #{tpu_custom_call.1} parent=23 // pred_check
          %p132 = pneg %p75
        $region26: #{tpu_custom_call.1} parent=23 // pred_check_branch
          %134 = sbr.rel (%p132) target = $region28
        $region27: #{tpu_custom_call.1} parent=23 // pred_region
          %s135 = smul.u32 160, %s13
          %s136 = ssub.s32 313, %s135
          %p137 = scmp.lt.s32.totalorder %s136, 160
          %s138 = scalar_select %p137, %s136, 160
          %s139 = smul.u32 128, %s138
          %p140 = scmp.lt.s32.totalorder %s135, 312
          %s141 = scalar_select %p140, %s135, 312
          %s142 = smul.addr %s141, 8
          %s143 = scalar_lea.vmem %s2, %s142
          %s144 = smul.u32 160, %s13
          %s145 = ssub.s32 313, %s144
          %p146 = scmp.lt.s32.totalorder %s145, 160
          %s147 = scalar_select %p146, %s145, 160
          %s148 = smul.u32 128, %s147
        $region28: #{tpu_custom_call.1} parent=23 // pred_fallthru
          _
      $region24: #{tpu_custom_call.1} parent=5 // pred_fallthru
        _
      %p149 = scmp.le.s32.totalorder 1, %s13
      %p150 = scmp.lt.s32.totalorder %s13, 3
      %p151 = pnand %p149, %p150
      %p152 = pneg %p151
      // Predicated region
      $region29: #{tpu_custom_call.1} parent=5 // pred_check
        _
      $region30: #{tpu_custom_call.1} parent=5 // pred_check_branch
        %154 = sbr.rel (%p151) target = $region32
      $region31: #{tpu_custom_call.1} parent=5 // pred_region
        %s155 = ssub.s32 %s13, 1
        %p156 = pneg %p34
        %p157 = pneg %p31
        %p158 = pneg %p55
        %p159 = pneg %p52
        %s160 = smul.u32 160, %s18
        %s161 = ssub.s32 313, %s160
        %p162 = scmp.lt.s32.totalorder %s161, 160
        %s163 = scalar_select %p162, %s161, 160
        %s164 = smul.u32 128, %s163
        %p165 = scmp.lt.s32.totalorder %s160, 312
        %s166 = scalar_select %p165, %s160, 312
        %s167 = smul.addr %s166, 8
        %s168 = scalar_lea.vmem %s2, %s167
        %p169 = pneg %p81
        %p170 = pneg %p78
        %p171 = pneg %p107
        %p172 = pneg %p104
        %s173 = sand.u32 %s94, 1
        %s174 = scalar_lea.sflag [#allocation4], %s173
        %s175 = sand.u32 %s94, 1
        %s176 = smul.addr %s175, 10
        %s177 = scalar_lea.vmem [#allocation3], %s176
        %s178 = smul.u32 160, %s18
        %s179 = ssub.s32 313, %s178
        %p180 = scmp.lt.s32.totalorder %s179, 160
        %s181 = scalar_select %p180, %s179, 160
        %s182 = smul.u32 128, %s181
        %p183 = scmp.lt.s32.totalorder %s178, 312
        %s184 = scalar_select %p183, %s178, 312
        %s185 = smul.addr %s184, 8
        %s186 = scalar_lea.vmem %s2, %s185
        %s187 = smul.u32 160, %s18
        %s188 = ssub.s32 313, %s187
        %p189 = scmp.lt.s32.totalorder %s188, 160
        %s190 = scalar_select %p189, %s188, 160
        %s191 = smul.u32 128, %s190
        %s192 = smul.u32 10, %s18
        %v193 = vld [vmem:[%s0] sm:$0x1]
        %v194 = vld [vmem:[%s186] sm:$0xff]
        %v195 = vld [vmem:[%s186 + $0x8] sm:$0xff]
        %v196 = vld [vmem:[%s186 + $0x10] sm:$0xff]
        %v197 = vld [vmem:[%s186 + $0x18] sm:$0xff]
        %v198 = vld [vmem:[%s186 + $0x20] sm:$0xff]
        %v199 = vld [vmem:[%s186 + $0x28] sm:$0xff]
        %v200 = vld [vmem:[%s186 + $0x30] sm:$0xff]
        %v201 = vld [vmem:[%s186 + $0x38] sm:$0xff]
        %v202 = vld [vmem:[%s186 + $0x40] sm:$0xff]
        %v203 = vld [vmem:[%s186 + $0x48] sm:$0xff]
        %v204 = vld [vmem:[%s186 + $0x50] sm:$0xff]
        %v205 = vld [vmem:[%s186 + $0x58] sm:$0xff]
        %v206 = vld [vmem:[%s186 + $0x60] sm:$0xff]
        %v207 = vld [vmem:[%s186 + $0x68] sm:$0xff]
        %v208 = vld [vmem:[%s186 + $0x70] sm:$0xff]
        %v209 = vld [vmem:[%s186 + $0x78] sm:$0xff]
        %v210 = vld [vmem:[%s186 + $0x80] sm:$0xff]
        %v211 = vld [vmem:[%s186 + $0x88] sm:$0xff]
        %v212 = vld [vmem:[%s186 + $0x90] sm:$0xff]
        %v213 = vld [vmem:[%s186 + $0x98] sm:$0xff]
        %v214 = vld [vmem:[%s186 + $0xa0] sm:$0xff]
        %v215 = vld [vmem:[%s186 + $0xa8] sm:$0xff]
        %v216 = vld [vmem:[%s186 + $0xb0] sm:$0xff]
        %v217 = vld [vmem:[%s186 + $0xb8] sm:$0xff]
        %v218 = vld [vmem:[%s186 + $0xc0] sm:$0xff]
        %v219 = vld [vmem:[%s186 + $0xc8] sm:$0xff]
        %v220 = vld [vmem:[%s186 + $0xd0] sm:$0xff]
        %v221 = vld [vmem:[%s186 + $0xd8] sm:$0xff]
        %v222 = vld [vmem:[%s186 + $0xe0] sm:$0xff]
        %v223 = vld [vmem:[%s186 + $0xe8] sm:$0xff]
        %v224 = vld [vmem:[%s186 + $0xf0] sm:$0xff]
        %v225 = vld [vmem:[%s186 + $0xf8] sm:$0xff]
        %v226 = vld [vmem:[%s186 + $0x100] sm:$0xff]
        %v227 = vld [vmem:[%s186 + $0x108] sm:$0xff]
        %v228 = vld [vmem:[%s186 + $0x110] sm:$0xff]
        %v229 = vld [vmem:[%s186 + $0x118] sm:$0xff]
        %v230 = vld [vmem:[%s186 + $0x120] sm:$0xff]
        %v231 = vld [vmem:[%s186 + $0x128] sm:$0xff]
        %v232 = vld [vmem:[%s186 + $0x130] sm:$0xff]
        %v233 = vld [vmem:[%s186 + $0x138] sm:$0xff]
        %v234 = vld [vmem:[%s186 + $0x140] sm:$0xff]
        %v235 = vld [vmem:[%s186 + $0x148] sm:$0xff]
        %v236 = vld [vmem:[%s186 + $0x150] sm:$0xff]
        %v237 = vld [vmem:[%s186 + $0x158] sm:$0xff]
        %v238 = vld [vmem:[%s186 + $0x160] sm:$0xff]
        %v239 = vld [vmem:[%s186 + $0x168] sm:$0xff]
        %v240 = vld [vmem:[%s186 + $0x170] sm:$0xff]
        %v241 = vld [vmem:[%s186 + $0x178] sm:$0xff]
        %v242 = vld [vmem:[%s186 + $0x180] sm:$0xff]
        %v243 = vld [vmem:[%s186 + $0x188] sm:$0xff]
        %v244 = vld [vmem:[%s186 + $0x190] sm:$0xff]
        %v245 = vld [vmem:[%s186 + $0x198] sm:$0xff]
        %v246 = vld [vmem:[%s186 + $0x1a0] sm:$0xff]
        %v247 = vld [vmem:[%s186 + $0x1a8] sm:$0xff]
        %v248 = vld [vmem:[%s186 + $0x1b0] sm:$0xff]
        %v249 = vld [vmem:[%s186 + $0x1b8] sm:$0xff]
        %v250 = vld [vmem:[%s186 + $0x1c0] sm:$0xff]
        %v251 = vld [vmem:[%s186 + $0x1c8] sm:$0xff]
        %v252 = vld [vmem:[%s186 + $0x1d0] sm:$0xff]
        %v253 = vld [vmem:[%s186 + $0x1d8] sm:$0xff]
        %v254 = vld [vmem:[%s186 + $0x1e0] sm:$0xff]
        %v255 = vld [vmem:[%s186 + $0x1e8] sm:$0xff]
        %v256 = vld [vmem:[%s186 + $0x1f0] sm:$0xff]
        %v257 = vld [vmem:[%s186 + $0x1f8] sm:$0xff]
        %v258 = vld [vmem:[%s186 + $0x200] sm:$0xff]
        %v259 = vld [vmem:[%s186 + $0x208] sm:$0xff]
        %v260 = vld [vmem:[%s186 + $0x210] sm:$0xff]
        %v261 = vld [vmem:[%s186 + $0x218] sm:$0xff]
        %v262 = vld [vmem:[%s186 + $0x220] sm:$0xff]
        %v263 = vld [vmem:[%s186 + $0x228] sm:$0xff]
        %v264 = vld [vmem:[%s186 + $0x230] sm:$0xff]
        %v265 = vld [vmem:[%s186 + $0x238] sm:$0xff]
        %v266 = vld [vmem:[%s186 + $0x240] sm:$0xff]
        %v267 = vld [vmem:[%s186 + $0x248] sm:$0xff]
        %v268 = vld [vmem:[%s186 + $0x250] sm:$0xff]
        %v269 = vld [vmem:[%s186 + $0x258] sm:$0xff]
        %v270 = vld [vmem:[%s186 + $0x260] sm:$0xff]
        %v271 = vld [vmem:[%s186 + $0x268] sm:$0xff]
        %v272 = vld [vmem:[%s186 + $0x270] sm:$0xff]
        %v273 = vld [vmem:[%s186 + $0x278] sm:$0xff]
        %v274 = vld [vmem:[%s186 + $0x280] sm:$0xff]
        %v275 = vld [vmem:[%s186 + $0x288] sm:$0xff]
        %v276 = vld [vmem:[%s186 + $0x290] sm:$0xff]
        %v277 = vld [vmem:[%s186 + $0x298] sm:$0xff]
        %v278 = vld [vmem:[%s186 + $0x2a0] sm:$0xff]
        %v279 = vld [vmem:[%s186 + $0x2a8] sm:$0xff]
        %v280 = vld [vmem:[%s186 + $0x2b0] sm:$0xff]
        %v281 = vld [vmem:[%s186 + $0x2b8] sm:$0xff]
        %v282 = vld [vmem:[%s186 + $0x2c0] sm:$0xff]
        %v283 = vld [vmem:[%s186 + $0x2c8] sm:$0xff]
        %v284 = vld [vmem:[%s186 + $0x2d0] sm:$0xff]
        %v285 = vld [vmem:[%s186 + $0x2d8] sm:$0xff]
        %v286 = vld [vmem:[%s186 + $0x2e0] sm:$0xff]
        %v287 = vld [vmem:[%s186 + $0x2e8] sm:$0xff]
        %v288 = vld [vmem:[%s186 + $0x2f0] sm:$0xff]
        %v289 = vld [vmem:[%s186 + $0x2f8] sm:$0xff]
        %v290 = vld [vmem:[%s186 + $0x300] sm:$0xff]
        %v291 = vld [vmem:[%s186 + $0x308] sm:$0xff]
        %v292 = vld [vmem:[%s186 + $0x310] sm:$0xff]
        %v293 = vld [vmem:[%s186 + $0x318] sm:$0xff]
        %v294 = vld [vmem:[%s186 + $0x320] sm:$0xff]
        %v295 = vld [vmem:[%s186 + $0x328] sm:$0xff]
        %v296 = vld [vmem:[%s186 + $0x330] sm:$0xff]
        %v297 = vld [vmem:[%s186 + $0x338] sm:$0xff]
        %v298 = vld [vmem:[%s186 + $0x340] sm:$0xff]
        %v299 = vld [vmem:[%s186 + $0x348] sm:$0xff]
        %v300 = vld [vmem:[%s186 + $0x350] sm:$0xff]
        %v301 = vld [vmem:[%s186 + $0x358] sm:$0xff]
        %v302 = vld [vmem:[%s186 + $0x360] sm:$0xff]
        %v303 = vld [vmem:[%s186 + $0x368] sm:$0xff]
        %v304 = vld [vmem:[%s186 + $0x370] sm:$0xff]
        %v305 = vld [vmem:[%s186 + $0x378] sm:$0xff]
        %v306 = vld [vmem:[%s186 + $0x380] sm:$0xff]
        %v307 = vld [vmem:[%s186 + $0x388] sm:$0xff]
        %v308 = vld [vmem:[%s186 + $0x390] sm:$0xff]
        %v309 = vld [vmem:[%s186 + $0x398] sm:$0xff]
        %v310 = vld [vmem:[%s186 + $0x3a0] sm:$0xff]
        %v311 = vld [vmem:[%s186 + $0x3a8] sm:$0xff]
        %v312 = vld [vmem:[%s186 + $0x3b0] sm:$0xff]
        %v313 = vld [vmem:[%s186 + $0x3b8] sm:$0xff]
        %v314 = vld [vmem:[%s186 + $0x3c0] sm:$0xff]
        %v315 = vld [vmem:[%s186 + $0x3c8] sm:$0xff]
        %v316 = vld [vmem:[%s186 + $0x3d0] sm:$0xff]
        %v317 = vld [vmem:[%s186 + $0x3d8] sm:$0xff]
        %v318 = vld [vmem:[%s186 + $0x3e0] sm:$0xff]
        %v319 = vld [vmem:[%s186 + $0x3e8] sm:$0xff]
        %v320 = vld [vmem:[%s186 + $0x3f0] sm:$0xff]
        %v321 = vld [vmem:[%s186 + $0x3f8] sm:$0xff]
        %v322 = vld [vmem:[%s186 + $0x400] sm:$0xff]
        %v323 = vld [vmem:[%s186 + $0x408] sm:$0xff]
        %v324 = vld [vmem:[%s186 + $0x410] sm:$0xff]
        %v325 = vld [vmem:[%s186 + $0x418] sm:$0xff]
        %v326 = vld [vmem:[%s186 + $0x420] sm:$0xff]
        %v327 = vld [vmem:[%s186 + $0x428] sm:$0xff]
        %v328 = vld [vmem:[%s186 + $0x430] sm:$0xff]
        %v329 = vld [vmem:[%s186 + $0x438] sm:$0xff]
        %v330 = vld [vmem:[%s186 + $0x440] sm:$0xff]
        %v331 = vld [vmem:[%s186 + $0x448] sm:$0xff]
        %v332 = vld [vmem:[%s186 + $0x450] sm:$0xff]
        %v333 = vld [vmem:[%s186 + $0x458] sm:$0xff]
        %v334 = vld [vmem:[%s186 + $0x460] sm:$0xff]
        %v335 = vld [vmem:[%s186 + $0x468] sm:$0xff]
        %v336 = vld [vmem:[%s186 + $0x470] sm:$0xff]
        %v337 = vld [vmem:[%s186 + $0x478] sm:$0xff]
        %v338 = vld [vmem:[%s186 + $0x480] sm:$0xff]
        %v339 = vld [vmem:[%s186 + $0x488] sm:$0xff]
        %v340 = vld [vmem:[%s186 + $0x490] sm:$0xff]
        %v341 = vld [vmem:[%s186 + $0x498] sm:$0xff]
        %v342 = vld [vmem:[%s186 + $0x4a0] sm:$0xff]
        %v343 = vld [vmem:[%s186 + $0x4a8] sm:$0xff]
        %v344 = vld [vmem:[%s186 + $0x4b0] sm:$0xff]
        %v345 = vld [vmem:[%s186 + $0x4b8] sm:$0xff]
        %v346 = vld [vmem:[%s186 + $0x4c0] sm:$0xff]
        %v347 = vld [vmem:[%s186 + $0x4c8] sm:$0xff]
        %v348 = vld [vmem:[%s186 + $0x4d0] sm:$0xff]
        %v349 = vld [vmem:[%s186 + $0x4d8] sm:$0xff]
        %v350 = vld [vmem:[%s186 + $0x4e0] sm:$0xff]
        %v351 = vld [vmem:[%s186 + $0x4e8] sm:$0xff]
        %v352 = vld [vmem:[%s186 + $0x4f0] sm:$0xff]
        %v353 = vld [vmem:[%s186 + $0x4f8] sm:$0xff]
        %s354 = sld [smem:[#allocation2]]
        %v355 = vstv %s354
        %vm356 = vcmask 261120
        %v358 = vsel %vm356, %v193, 0
        %v361 = vsel %vm356, %v194, 0
        %v364 = vsel %vm356, %v195, 0
        %v367 = vsel %vm356, %v196, 0
        %v370 = vsel %vm356, %v197, 0
        %v373 = vsel %vm356, %v198, 0
        %v376 = vsel %vm356, %v199, 0
        %v379 = vsel %vm356, %v200, 0
        %v382 = vsel %vm356, %v201, 0
        %v385 = vsel %vm356, %v202, 0
        %v388 = vsel %vm356, %v203, 0
        %v391 = vsel %vm356, %v204, 0
        %v394 = vsel %vm356, %v205, 0
        %v397 = vsel %vm356, %v206, 0
        %v400 = vsel %vm356, %v207, 0
        %v403 = vsel %vm356, %v208, 0
        %v406 = vsel %vm356, %v209, 0
        %v409 = vsel %vm356, %v210, 0
        %v412 = vsel %vm356, %v211, 0
        %v415 = vsel %vm356, %v212, 0
        %v418 = vsel %vm356, %v213, 0
        %v421 = vsel %vm356, %v214, 0
        %v424 = vsel %vm356, %v215, 0
        %v427 = vsel %vm356, %v216, 0
        %v430 = vsel %vm356, %v217, 0
        %v433 = vsel %vm356, %v218, 0
        %v436 = vsel %vm356, %v219, 0
        %v439 = vsel %vm356, %v220, 0
        %v442 = vsel %vm356, %v221, 0
        %v445 = vsel %vm356, %v222, 0
        %v448 = vsel %vm356, %v223, 0
        %v451 = vsel %vm356, %v224, 0
        %v454 = vsel %vm356, %v225, 0
        %v457 = vsel %vm356, %v226, 0
        %v460 = vsel %vm356, %v227, 0
        %v463 = vsel %vm356, %v228, 0
        %v466 = vsel %vm356, %v229, 0
        %v469 = vsel %vm356, %v230, 0
        %v472 = vsel %vm356, %v231, 0
        %v475 = vsel %vm356, %v232, 0
        %v478 = vsel %vm356, %v233, 0
        %v481 = vsel %vm356, %v234, 0
        %v484 = vsel %vm356, %v235, 0
        %v487 = vsel %vm356, %v236, 0
        %v490 = vsel %vm356, %v237, 0
        %v493 = vsel %vm356, %v238, 0
        %v496 = vsel %vm356, %v239, 0
        %v499 = vsel %vm356, %v240, 0
        %v502 = vsel %vm356, %v241, 0
        %v505 = vsel %vm356, %v242, 0
        %v508 = vsel %vm356, %v243, 0
        %v511 = vsel %vm356, %v244, 0
        %v514 = vsel %vm356, %v245, 0
        %v517 = vsel %vm356, %v246, 0
        %v520 = vsel %vm356, %v247, 0
        %v523 = vsel %vm356, %v248, 0
        %v526 = vsel %vm356, %v249, 0
        %v529 = vsel %vm356, %v250, 0
        %v532 = vsel %vm356, %v251, 0
        %v535 = vsel %vm356, %v252, 0
        %v538 = vsel %vm356, %v253, 0
        %v541 = vsel %vm356, %v254, 0
        %v544 = vsel %vm356, %v255, 0
        %v547 = vsel %vm356, %v256, 0
        %v550 = vsel %vm356, %v257, 0
        %v553 = vsel %vm356, %v258, 0
        %v556 = vsel %vm356, %v259, 0
        %v559 = vsel %vm356, %v260, 0
        %v562 = vsel %vm356, %v261, 0
        %v565 = vsel %vm356, %v262, 0
        %v568 = vsel %vm356, %v263, 0
        %v571 = vsel %vm356, %v264, 0
        %v574 = vsel %vm356, %v265, 0
        %v577 = vsel %vm356, %v266, 0
        %v580 = vsel %vm356, %v267, 0
        %v583 = vsel %vm356, %v268, 0
        %v586 = vsel %vm356, %v269, 0
        %v589 = vsel %vm356, %v270, 0
        %v592 = vsel %vm356, %v271, 0
        %v595 = vsel %vm356, %v272, 0
        %v598 = vsel %vm356, %v273, 0
        %v601 = vsel %vm356, %v274, 0
        %v604 = vsel %vm356, %v275, 0
        %v607 = vsel %vm356, %v276, 0
        %v610 = vsel %vm356, %v277, 0
        %v613 = vsel %vm356, %v278, 0
        %v616 = vsel %vm356, %v279, 0
        %v619 = vsel %vm356, %v280, 0
        %v622 = vsel %vm356, %v281, 0
        %v625 = vsel %vm356, %v282, 0
        %v628 = vsel %vm356, %v283, 0
        %v631 = vsel %vm356, %v284, 0
        %v634 = vsel %vm356, %v285, 0
        %v637 = vsel %vm356, %v286, 0
        %v640 = vsel %vm356, %v287, 0
        %v643 = vsel %vm356, %v288, 0
        %v646 = vsel %vm356, %v289, 0
        %v649 = vsel %vm356, %v290, 0
        %v652 = vsel %vm356, %v291, 0
        %v655 = vsel %vm356, %v292, 0
        %v658 = vsel %vm356, %v293, 0
        %v661 = vsel %vm356, %v294, 0
        %v664 = vsel %vm356, %v295, 0
        %v667 = vsel %vm356, %v296, 0
        %v670 = vsel %vm356, %v297, 0
        %v673 = vsel %vm356, %v298, 0
        %v676 = vsel %vm356, %v299, 0
        %v679 = vsel %vm356, %v300, 0
        %v682 = vsel %vm356, %v301, 0
        %v685 = vsel %vm356, %v302, 0
        %v688 = vsel %vm356, %v303, 0
        %v691 = vsel %vm356, %v304, 0
        %v694 = vsel %vm356, %v305, 0
        %v697 = vsel %vm356, %v306, 0
        %v700 = vsel %vm356, %v307, 0
        %v703 = vsel %vm356, %v308, 0
        %v706 = vsel %vm356, %v309, 0
        %v709 = vsel %vm356, %v310, 0
        %v712 = vsel %vm356, %v311, 0
        %v715 = vsel %vm356, %v312, 0
        %v718 = vsel %vm356, %v313, 0
        %v721 = vsel %vm356, %v314, 0
        %v724 = vsel %vm356, %v315, 0
        %v727 = vsel %vm356, %v316, 0
        %v730 = vsel %vm356, %v317, 0
        %v733 = vsel %vm356, %v318, 0
        %v736 = vsel %vm356, %v319, 0
        %v739 = vsel %vm356, %v320, 0
        %v742 = vsel %vm356, %v321, 0
        %v745 = vsel %vm356, %v322, 0
        %v748 = vsel %vm356, %v323, 0
        %v751 = vsel %vm356, %v324, 0
        %v754 = vsel %vm356, %v325, 0
        %v757 = vsel %vm356, %v326, 0
        %v760 = vsel %vm356, %v327, 0
        %v763 = vsel %vm356, %v328, 0
        %v766 = vsel %vm356, %v329, 0
        %v769 = vsel %vm356, %v330, 0
        %v772 = vsel %vm356, %v331, 0
        %v775 = vsel %vm356, %v332, 0
        %v778 = vsel %vm356, %v333, 0
        %v781 = vsel %vm356, %v334, 0
        %v784 = vsel %vm356, %v335, 0
        %v787 = vsel %vm356, %v336, 0
        %v790 = vsel %vm356, %v337, 0
        %v793 = vsel %vm356, %v338, 0
        %v796 = vsel %vm356, %v339, 0
        %v799 = vsel %vm356, %v340, 0
        %v802 = vsel %vm356, %v341, 0
        %v805 = vsel %vm356, %v342, 0
        %v808 = vsel %vm356, %v343, 0
        %v811 = vsel %vm356, %v344, 0
        %v814 = vsel %vm356, %v345, 0
        %v817 = vsel %vm356, %v346, 0
        %v820 = vsel %vm356, %v347, 0
        %v823 = vsel %vm356, %v348, 0
        %v826 = vsel %vm356, %v349, 0
        %v829 = vsel %vm356, %v350, 0
        %v832 = vsel %vm356, %v351, 0
        %v835 = vsel %vm356, %v352, 0
        %v838 = vsel %vm356, %v353, 0
        %840 = vmatprep.subr.mxu0 0.0
        %841 = vmatpush1.xpose.msra.mxu0 %v361
        %842 = vmatprep.subr.mxu0 0.0
        %843 = vmatpush1.xpose.msra.mxu0 %v364
        %844 = vmatprep.subr.mxu0 0.0
        %845 = vmatpush1.xpose.msra.mxu0 %v367
        %846 = vmatprep.subr.mxu0 0.0
        %847 = vmatpush1.xpose.msra.mxu0 %v370
        %848 = vmatprep.subr.mxu0 0.0
        %849 = vmatpush1.xpose.msra.mxu0 %v373
        %850 = vmatprep.subr.mxu0 0.0
        %851 = vmatpush1.xpose.msra.mxu0 %v376
        %852 = vmatprep.subr.mxu0 0.0
        %853 = vmatpush1.xpose.msra.mxu0 %v379
        %854 = vmatprep.subr.mxu0 0.0
        %855 = vmatpush1.xpose.msra.mxu0 %v382
        %856 = vmatprep.subr.mxu0 0.0
        %857 = vmatpush1.xpose.msra.mxu0 %v385
        %858 = vmatprep.subr.mxu0 0.0
        %859 = vmatpush1.xpose.msra.mxu0 %v388
        %860 = vmatprep.subr.mxu0 0.0
        %861 = vmatpush1.xpose.msra.mxu0 %v391
        %862 = vmatprep.subr.mxu0 0.0
        %863 = vmatpush1.xpose.msra.mxu0 %v394
        %864 = vmatprep.subr.mxu0 0.0
        %865 = vmatpush1.xpose.msra.mxu0 %v397
        %866 = vmatprep.subr.mxu0 0.0
        %867 = vmatpush1.xpose.msra.mxu0 %v400
        %868 = vmatprep.subr.mxu0 0.0
        %869 = vmatpush1.xpose.msra.mxu0 %v403
        %870 = vmatprep.subr.mxu0 0.0
        %871 = vmatpush1.xpose.msra.mxu0 %v406
        %872 = vmatprep.subr.mxu0 0.0
        %873 = vmatpush1.xpose.msra.mxu0 %v409
        %874 = vmatprep.subr.mxu0 0.0
        %875 = vmatpush1.xpose.msra.mxu0 %v412
        %876 = vmatprep.subr.mxu0 0.0
        %877 = vmatpush1.xpose.msra.mxu0 %v415
        %878 = vmatprep.subr.mxu0 0.0
        %879 = vmatpush1.xpose.msra.mxu0 %v418
        %880 = vmatprep.subr.mxu0 0.0
        %881 = vmatpush1.xpose.msra.mxu0 %v421
        %882 = vmatprep.subr.mxu0 0.0
        %883 = vmatpush1.xpose.msra.mxu0 %v424
        %884 = vmatprep.subr.mxu0 0.0
        %885 = vmatpush1.xpose.msra.mxu0 %v427
        %886 = vmatprep.subr.mxu0 0.0
        %887 = vmatpush1.xpose.msra.mxu0 %v430
        %888 = vmatprep.subr.mxu0 0.0
        %889 = vmatpush1.xpose.msra.mxu0 %v433
        %890 = vmatprep.subr.mxu0 0.0
        %891 = vmatpush1.xpose.msra.mxu0 %v436
        %892 = vmatprep.subr.mxu0 0.0
        %893 = vmatpush1.xpose.msra.mxu0 %v439
        %894 = vmatprep.subr.mxu0 0.0
        %895 = vmatpush1.xpose.msra.mxu0 %v442
        %896 = vmatprep.subr.mxu0 0.0
        %897 = vmatpush1.xpose.msra.mxu0 %v445
        %898 = vmatprep.subr.mxu0 0.0
        %899 = vmatpush1.xpose.msra.mxu0 %v448
        %900 = vmatprep.subr.mxu0 0.0
        %901 = vmatpush1.xpose.msra.mxu0 %v451
        %902 = vmatprep.subr.mxu0 0.0
        %903 = vmatpush1.xpose.msra.mxu0 %v454
        %904 = vmatprep.mubr.f32.mxu0 0.0
        %905 = vmatmul.mubr.f32.gmra.mrb[0].mxu0 %v358
        %v906 = vpop.f32.mrb[0].mxu0
        %v907 = vadd.f32 %v355, %v906
        %v908 = vpop.f32.mrb[0].mxu0
        %v909 = vadd.f32 %v355, %v908
        %910 = vdwg.mxu0
        %911 = vmatprep.subr.mxu0 0.0
        %912 = vmatpush1.xpose.msra.mxu0 %v457
        %913 = vmatprep.subr.mxu0 0.0
        %914 = vmatpush1.xpose.msra.mxu0 %v460
        %915 = vmatprep.subr.mxu0 0.0
        %916 = vmatpush1.xpose.msra.mxu0 %v463
        %917 = vmatprep.subr.mxu0 0.0
        %918 = vmatpush1.xpose.msra.mxu0 %v466
        %919 = vmatprep.subr.mxu0 0.0
        %920 = vmatpush1.xpose.msra.mxu0 %v469
        %921 = vmatprep.subr.mxu0 0.0
        %922 = vmatpush1.xpose.msra.mxu0 %v472
        %923 = vmatprep.subr.mxu0 0.0
        %924 = vmatpush1.xpose.msra.mxu0 %v475
        %925 = vmatprep.subr.mxu0 0.0
        %926 = vmatpush1.xpose.msra.mxu0 %v478
        %927 = vmatprep.subr.mxu0 0.0
        %928 = vmatpush1.xpose.msra.mxu0 %v481
        %929 = vmatprep.subr.mxu0 0.0
        %930 = vmatpush1.xpose.msra.mxu0 %v484
        %931 = vmatprep.subr.mxu0 0.0
        %932 = vmatpush1.xpose.msra.mxu0 %v487
        %933 = vmatprep.subr.mxu0 0.0
        %934 = vmatpush1.xpose.msra.mxu0 %v490
        %935 = vmatprep.subr.mxu0 0.0
        %936 = vmatpush1.xpose.msra.mxu0 %v493
        %937 = vmatprep.subr.mxu0 0.0
        %938 = vmatpush1.xpose.msra.mxu0 %v496
        %939 = vmatprep.subr.mxu0 0.0
        %940 = vmatpush1.xpose.msra.mxu0 %v499
        %941 = vmatprep.subr.mxu0 0.0
        %942 = vmatpush1.xpose.msra.mxu0 %v502
        %943 = vmatprep.subr.mxu0 0.0
        %944 = vmatpush1.xpose.msra.mxu0 %v505
        %945 = vmatprep.subr.mxu0 0.0
        %946 = vmatpush1.xpose.msra.mxu0 %v508
        %947 = vmatprep.subr.mxu0 0.0
        %948 = vmatpush1.xpose.msra.mxu0 %v511
        %949 = vmatprep.subr.mxu0 0.0
        %950 = vmatpush1.xpose.msra.mxu0 %v514
        %951 = vmatprep.subr.mxu0 0.0
        %952 = vmatpush1.xpose.msra.mxu0 %v517
        %953 = vmatprep.subr.mxu0 0.0
        %954 = vmatpush1.xpose.msra.mxu0 %v520
        %955 = vmatprep.subr.mxu0 0.0
        %956 = vmatpush1.xpose.msra.mxu0 %v523
        %957 = vmatprep.subr.mxu0 0.0
        %958 = vmatpush1.xpose.msra.mxu0 %v526
        %959 = vmatprep.subr.mxu0 0.0
        %960 = vmatpush1.xpose.msra.mxu0 %v529
        %961 = vmatprep.subr.mxu0 0.0
        %962 = vmatpush1.xpose.msra.mxu0 %v532
        %963 = vmatprep.subr.mxu0 0.0
        %964 = vmatpush1.xpose.msra.mxu0 %v535
        %965 = vmatprep.subr.mxu0 0.0
        %966 = vmatpush1.xpose.msra.mxu0 %v538
        %967 = vmatprep.subr.mxu0 0.0
        %968 = vmatpush1.xpose.msra.mxu0 %v541
        %969 = vmatprep.subr.mxu0 0.0
        %970 = vmatpush1.xpose.msra.mxu0 %v544
        %971 = vmatprep.subr.mxu0 0.0
        %972 = vmatpush1.xpose.msra.mxu0 %v547
        %973 = vmatprep.subr.mxu0 0.0
        %974 = vmatpush1.xpose.msra.mxu0 %v550
        %975 = vmatprep.mubr.f32.mxu0 0.0
        %976 = vmatmul.mubr.f32.gmra.mrb[0].mxu0 %v358
        %v977 = vpop.f32.mrb[0].mxu0
        %v978 = vadd.f32 %v355, %v977
        %v979 = vpop.f32.mrb[0].mxu0
        %v980 = vadd.f32 %v355, %v979
        %981 = vdwg.mxu0
        %982 = vmatprep.subr.mxu0 0.0
        %983 = vmatpush1.xpose.msra.mxu0 %v553
        %984 = vmatprep.subr.mxu0 0.0
        %985 = vmatpush1.xpose.msra.mxu0 %v556
        %986 = vmatprep.subr.mxu0 0.0
        %987 = vmatpush1.xpose.msra.mxu0 %v559
        %988 = vmatprep.subr.mxu0 0.0
        %989 = vmatpush1.xpose.msra.mxu0 %v562
        %990 = vmatprep.subr.mxu0 0.0
        %991 = vmatpush1.xpose.msra.mxu0 %v565
        %992 = vmatprep.subr.mxu0 0.0
        %993 = vmatpush1.xpose.msra.mxu0 %v568
        %994 = vmatprep.subr.mxu0 0.0
        %995 = vmatpush1.xpose.msra.mxu0 %v571
        %996 = vmatprep.subr.mxu0 0.0
        %997 = vmatpush1.xpose.msra.mxu0 %v574
        %998 = vmatprep.subr.mxu0 0.0
        %999 = vmatpush1.xpose.msra.mxu0 %v577
        %1000 = vmatprep.subr.mxu0 0.0
        %1001 = vmatpush1.xpose.msra.mxu0 %v580
        %1002 = vmatprep.subr.mxu0 0.0
        %1003 = vmatpush1.xpose.msra.mxu0 %v583
        %1004 = vmatprep.subr.mxu0 0.0
        %1005 = vmatpush1.xpose.msra.mxu0 %v586
        %1006 = vmatprep.subr.mxu0 0.0
        %1007 = vmatpush1.xpose.msra.mxu0 %v589
        %1008 = vmatprep.subr.mxu0 0.0
        %1009 = vmatpush1.xpose.msra.mxu0 %v592
        %1010 = vmatprep.subr.mxu0 0.0
        %1011 = vmatpush1.xpose.msra.mxu0 %v595
        %1012 = vmatprep.subr.mxu0 0.0
        %1013 = vmatpush1.xpose.msra.mxu0 %v598
        %1014 = vmatprep.subr.mxu0 0.0
        %1015 = vmatpush1.xpose.msra.mxu0 %v601
        %1016 = vmatprep.subr.mxu0 0.0
        %1017 = vmatpush1.xpose.msra.mxu0 %v604
        %1018 = vmatprep.subr.mxu0 0.0
        %1019 = vmatpush1.xpose.msra.mxu0 %v607
        %1020 = vmatprep.subr.mxu0 0.0
        %1021 = vmatpush1.xpose.msra.mxu0 %v610
        %1022 = vmatprep.subr.mxu0 0.0
        %1023 = vmatpush1.xpose.msra.mxu0 %v613
        %1024 = vmatprep.subr.mxu0 0.0
        %1025 = vmatpush1.xpose.msra.mxu0 %v616
        %1026 = vmatprep.subr.mxu0 0.0
        %1027 = vmatpush1.xpose.msra.mxu0 %v619
        %1028 = vmatprep.subr.mxu0 0.0
        %1029 = vmatpush1.xpose.msra.mxu0 %v622
        %1030 = vmatprep.subr.mxu0 0.0
        %1031 = vmatpush1.xpose.msra.mxu0 %v625
        %1032 = vmatprep.subr.mxu0 0.0
        %1033 = vmatpush1.xpose.msra.mxu0 %v628
        %1034 = vmatprep.subr.mxu0 0.0
        %1035 = vmatpush1.xpose.msra.mxu0 %v631
        %1036 = vmatprep.subr.mxu0 0.0
        %1037 = vmatpush1.xpose.msra.mxu0 %v634
        %1038 = vmatprep.subr.mxu0 0.0
        %1039 = vmatpush1.xpose.msra.mxu0 %v637
        %1040 = vmatprep.subr.mxu0 0.0
        %1041 = vmatpush1.xpose.msra.mxu0 %v640
        %1042 = vmatprep.subr.mxu0 0.0
        %1043 = vmatpush1.xpose.msra.mxu0 %v643
        %1044 = vmatprep.subr.mxu0 0.0
        %1045 = vmatpush1.xpose.msra.mxu0 %v646
        %1046 = vmatprep.mubr.f32.mxu0 0.0
        %1047 = vmatmul.mubr.f32.gmra.mrb[0].mxu0 %v358
        %v1048 = vpop.f32.mrb[0].mxu0
        %v1049 = vadd.f32 %v355, %v1048
        %v1050 = vpop.f32.mrb[0].mxu0
        %v1051 = vadd.f32 %v355, %v1050
        %1052 = vdwg.mxu0
        %1053 = vmatprep.subr.mxu0 0.0
        %1054 = vmatpush1.xpose.msra.mxu0 %v649
        %1055 = vmatprep.subr.mxu0 0.0
        %1056 = vmatpush1.xpose.msra.mxu0 %v652
        %1057 = vmatprep.subr.mxu0 0.0
        %1058 = vmatpush1.xpose.msra.mxu0 %v655
        %1059 = vmatprep.subr.mxu0 0.0
        %1060 = vmatpush1.xpose.msra.mxu0 %v658
        %1061 = vmatprep.subr.mxu0 0.0
        %1062 = vmatpush1.xpose.msra.mxu0 %v661
        %1063 = vmatprep.subr.mxu0 0.0
        %1064 = vmatpush1.xpose.msra.mxu0 %v664
        %1065 = vmatprep.subr.mxu0 0.0
        %1066 = vmatpush1.xpose.msra.mxu0 %v667
        %1067 = vmatprep.subr.mxu0 0.0
        %1068 = vmatpush1.xpose.msra.mxu0 %v670
        %1069 = vmatprep.subr.mxu0 0.0
        %1070 = vmatpush1.xpose.msra.mxu0 %v673
        %1071 = vmatprep.subr.mxu0 0.0
        %1072 = vmatpush1.xpose.msra.mxu0 %v676
        %1073 = vmatprep.subr.mxu0 0.0
        %1074 = vmatpush1.xpose.msra.mxu0 %v679
        %1075 = vmatprep.subr.mxu0 0.0
        %1076 = vmatpush1.xpose.msra.mxu0 %v682
        %1077 = vmatprep.subr.mxu0 0.0
        %1078 = vmatpush1.xpose.msra.mxu0 %v685
        %1079 = vmatprep.subr.mxu0 0.0
        %1080 = vmatpush1.xpose.msra.mxu0 %v688
        %1081 = vmatprep.subr.mxu0 0.0
        %1082 = vmatpush1.xpose.msra.mxu0 %v691
        %1083 = vmatprep.subr.mxu0 0.0
        %1084 = vmatpush1.xpose.msra.mxu0 %v694
        %1085 = vmatprep.subr.mxu0 0.0
        %1086 = vmatpush1.xpose.msra.mxu0 %v697
        %1087 = vmatprep.subr.mxu0 0.0
        %1088 = vmatpush1.xpose.msra.mxu0 %v700
        %1089 = vmatprep.subr.mxu0 0.0
        %1090 = vmatpush1.xpose.msra.mxu0 %v703
        %1091 = vmatprep.subr.mxu0 0.0
        %1092 = vmatpush1.xpose.msra.mxu0 %v706
        %1093 = vmatprep.subr.mxu0 0.0
        %1094 = vmatpush1.xpose.msra.mxu0 %v709
        %1095 = vmatprep.subr.mxu0 0.0
        %1096 = vmatpush1.xpose.msra.mxu0 %v712
        %1097 = vmatprep.subr.mxu0 0.0
        %1098 = vmatpush1.xpose.msra.mxu0 %v715
        %1099 = vmatprep.subr.mxu0 0.0
        %1100 = vmatpush1.xpose.msra.mxu0 %v718
        %1101 = vmatprep.subr.mxu0 0.0
        %1102 = vmatpush1.xpose.msra.mxu0 %v721
        %1103 = vmatprep.subr.mxu0 0.0
        %1104 = vmatpush1.xpose.msra.mxu0 %v724
        %1105 = vmatprep.subr.mxu0 0.0
        %1106 = vmatpush1.xpose.msra.mxu0 %v727
        %1107 = vmatprep.subr.mxu0 0.0
        %1108 = vmatpush1.xpose.msra.mxu0 %v730
        %1109 = vmatprep.subr.mxu0 0.0
        %1110 = vmatpush1.xpose.msra.mxu0 %v733
        %1111 = vmatprep.subr.mxu0 0.0
        %1112 = vmatpush1.xpose.msra.mxu0 %v736
        %1113 = vmatprep.subr.mxu0 0.0
        %1114 = vmatpush1.xpose.msra.mxu0 %v739
        %1115 = vmatprep.subr.mxu0 0.0
        %1116 = vmatpush1.xpose.msra.mxu0 %v742
        %1117 = vmatprep.mubr.f32.mxu0 0.0
        %1118 = vmatmul.mubr.f32.gmra.mrb[0].mxu0 %v358
        %v1119 = vpop.f32.mrb[0].mxu0
        %v1120 = vadd.f32 %v355, %v1119
        %v1121 = vpop.f32.mrb[0].mxu0
        %v1122 = vadd.f32 %v355, %v1121
        %1123 = vdwg.mxu0
        %1124 = vmatprep.subr.mxu0 0.0
        %1125 = vmatpush1.xpose.msra.mxu0 %v745
        %1126 = vmatprep.subr.mxu0 0.0
        %1127 = vmatpush1.xpose.msra.mxu0 %v748
        %1128 = vmatprep.subr.mxu0 0.0
        %1129 = vmatpush1.xpose.msra.mxu0 %v751
        %1130 = vmatprep.subr.mxu0 0.0
        %1131 = vmatpush1.xpose.msra.mxu0 %v754
        %1132 = vmatprep.subr.mxu0 0.0
        %1133 = vmatpush1.xpose.msra.mxu0 %v757
        %1134 = vmatprep.subr.mxu0 0.0
        %1135 = vmatpush1.xpose.msra.mxu0 %v760
        %1136 = vmatprep.subr.mxu0 0.0
        %1137 = vmatpush1.xpose.msra.mxu0 %v763
        %1138 = vmatprep.subr.mxu0 0.0
        %1139 = vmatpush1.xpose.msra.mxu0 %v766
        %1140 = vmatprep.subr.mxu0 0.0
        %1141 = vmatpush1.xpose.msra.mxu0 %v769
        %1142 = vmatprep.subr.mxu0 0.0
        %1143 = vmatpush1.xpose.msra.mxu0 %v772
        %1144 = vmatprep.subr.mxu0 0.0
        %1145 = vmatpush1.xpose.msra.mxu0 %v775
        %1146 = vmatprep.subr.mxu0 0.0
        %1147 = vmatpush1.xpose.msra.mxu0 %v778
        %1148 = vmatprep.subr.mxu0 0.0
        %1149 = vmatpush1.xpose.msra.mxu0 %v781
        %1150 = vmatprep.subr.mxu0 0.0
        %1151 = vmatpush1.xpose.msra.mxu0 %v784
        %1152 = vmatprep.subr.mxu0 0.0
        %1153 = vmatpush1.xpose.msra.mxu0 %v787
        %1154 = vmatprep.subr.mxu0 0.0
        %1155 = vmatpush1.xpose.msra.mxu0 %v790
        %1156 = vmatprep.subr.mxu0 0.0
        %1157 = vmatpush1.xpose.msra.mxu0 %v793
        %1158 = vmatprep.subr.mxu0 0.0
        %1159 = vmatpush1.xpose.msra.mxu0 %v796
        %1160 = vmatprep.subr.mxu0 0.0
        %1161 = vmatpush1.xpose.msra.mxu0 %v799
        %1162 = vmatprep.subr.mxu0 0.0
        %1163 = vmatpush1.xpose.msra.mxu0 %v802
        %1164 = vmatprep.subr.mxu0 0.0
        %1165 = vmatpush1.xpose.msra.mxu0 %v805
        %1166 = vmatprep.subr.mxu0 0.0
        %1167 = vmatpush1.xpose.msra.mxu0 %v808
        %1168 = vmatprep.subr.mxu0 0.0
        %1169 = vmatpush1.xpose.msra.mxu0 %v811
        %1170 = vmatprep.subr.mxu0 0.0
        %1171 = vmatpush1.xpose.msra.mxu0 %v814
        %1172 = vmatprep.subr.mxu0 0.0
        %1173 = vmatpush1.xpose.msra.mxu0 %v817
        %1174 = vmatprep.subr.mxu0 0.0
        %1175 = vmatpush1.xpose.msra.mxu0 %v820
        %1176 = vmatprep.subr.mxu0 0.0
        %1177 = vmatpush1.xpose.msra.mxu0 %v823
        %1178 = vmatprep.subr.mxu0 0.0
        %1179 = vmatpush1.xpose.msra.mxu0 %v826
        %1180 = vmatprep.subr.mxu0 0.0
        %1181 = vmatpush1.xpose.msra.mxu0 %v829
        %1182 = vmatprep.subr.mxu0 0.0
        %1183 = vmatpush1.xpose.msra.mxu0 %v832
        %1184 = vmatprep.subr.mxu0 0.0
        %1185 = vmatpush1.xpose.msra.mxu0 %v835
        %1186 = vmatprep.subr.mxu0 0.0
        %1187 = vmatpush1.xpose.msra.mxu0 %v838
        %1188 = vmatprep.mubr.f32.mxu0 0.0
        %1189 = vmatmul.mubr.f32.gmra.mrb[0].mxu0 %v358
        %v1190 = vpop.f32.mrb[0].mxu0
        %v1191 = vadd.f32 %v355, %v1190
        %v1192 = vpop.f32.mrb[0].mxu0
        %v1193 = vadd.f32 %v355, %v1192
        %1194 = vdwg.mxu0
        %v1205 = vcombine.low %v907, %v909
        %v1206 = vcombine.low %v978, %v980
        %v1207 = vcombine.low %v1049, %v1051
        %v1208 = vcombine.low %v1120, %v1122
        %v1210 = vunpack.c.l.s4 1966171168
        %v1211 = vunpack.c.0.s8 %v1210
        %v1212 = vlaneseq
        %v1213 = vshrl.u32 %v1212, 7
        %v1214 = vsub.s32 %v1211, %v1213
        %v1215 = vrot.slane %v1205, %v1214
        %v1217 = vunpack.c.l.s4 1966171168
        %v1218 = vunpack.c.0.s8 %v1217
        %v1219 = vlaneseq
        %v1220 = vshrl.u32 %v1219, 7
        %v1221 = vsub.s32 %v1218, %v1220
        %v1222 = vrot.slane %v1206, %v1221
        %v1224 = vunpack.c.l.s4 1966171168
        %v1225 = vunpack.c.0.s8 %v1224
        %v1226 = vlaneseq
        %v1227 = vshrl.u32 %v1226, 7
        %v1228 = vsub.s32 %v1225, %v1227
        %v1229 = vrot.slane %v1207, %v1228
        %v1231 = vunpack.c.l.s4 1966171168
        %v1232 = vunpack.c.0.s8 %v1231
        %v1233 = vlaneseq
        %v1234 = vshrl.u32 %v1233, 7
        %v1235 = vsub.s32 %v1232, %v1234
        %v1236 = vrot.slane %v1208, %v1235
        %v1237 = vcombine.low %v1215, %v1222
        %v1238 = vcombine.low %v1229, %v1236
        %v1240 = vunpack.c.l.s4 1966171168
        %v1241 = vunpack.c.0.s8 %v1240
        %v1242 = vlaneseq
        %v1243 = vshrl.u32 %v1242, 7
        %v1244 = vsub.s32 %v1241, %v1243
        %v1245 = vrot.slane %v1237, %v1244
        %v1247 = vunpack.c.l.s4 1966171168
        %v1248 = vunpack.c.0.s8 %v1247
        %v1249 = vlaneseq
        %v1250 = vshrl.u32 %v1249, 7
        %v1251 = vsub.s32 %v1248, %v1250
        %v1252 = vrot.slane %v1238, %v1251
        %v1253 = vcombine.low %v1245, %v1252
        %v1254 = vcombine.low %v1191, %v1193
        %v1256 = vunpack.c.l.s4 1966171168
        %v1257 = vunpack.c.0.s8 %v1256
        %v1258 = vlaneseq
        %v1259 = vshrl.u32 %v1258, 7
        %v1260 = vsub.s32 %v1257, %v1259
        %v1261 = vrot.slane %v1254, %v1260
        %v1263 = vunpack.c.l.s4 1966171168
        %v1264 = vunpack.c.0.s8 %v1263
        %v1265 = vlaneseq
        %v1266 = vshrl.u32 %v1265, 7
        %v1267 = vsub.s32 %v1264, %v1266
        %v1268 = vrot.slane %v1261, %v1267
        %1271 = vst [vmem:[%s177] sm:$0xff] %v1253
        %v1272 = vlaneseq
        %vm1273 = vcmp.ge.s32.totalorder %v1272, 0
        %vm1274 = vcmp.lt.s32.totalorder %v1272, 256
        %vm1275 = vmand %vm1273, %vm1274
        %1276 = vst.msk [vmem:[%s177 + $0x8] sm:$0x3] %vm1275, %v1268
        %s1277 = sand.u32 %s94, 1
        %s1278 = scalar_lea.sflag [#allocation4], %s1277
        %s1279 = sand.u32 %s94, 1
        %s1280 = smul.addr %s1279, 10
        %s1281 = scalar_lea.vmem [#allocation3], %s1280
        // Predicated region
        $region33: #{tpu_custom_call.1} parent=31 // pred_check
          %p1282 = pneg %p104
        $region34: #{tpu_custom_call.1} parent=31 // pred_check_branch
          %1284 = sbr.rel (%p1282) target = $region36
        $region35: #{tpu_custom_call.1} parent=31 // pred_region
          %s1285 = smul.u32 10, %s18
          %s1287 = ssub.s32 160, 160
          %1288 = vsyncadd %s1278, %s1287
          %s1289 = smul.addr %s1285, 16
          %s1290 = scalar_lea.hbm %s3, %s1289
          %s1292 = sshll.u32 %s1281, 4
          %s1293 = int_to_ptr.vmem [resolvable:$true] %s1292
          %1295 = dma.vmem_to_hbm [thread:$0]  %s1293, 160, %s1290, %s1278
        $region36: #{tpu_custom_call.1} parent=31 // pred_fallthru
          _
      $region32: #{tpu_custom_call.1} parent=5 // pred_fallthru
        _
      %p1296 = scmp.le.s32.totalorder 2, %s13
      // Predicated region
      $region37: #{tpu_custom_call.1} parent=5 // pred_check
        %p1297 = pneg %p1296
      $region38: #{tpu_custom_call.1} parent=5 // pred_check_branch
        %1299 = sbr.rel (%p1297) target = $region40
      $region39: #{tpu_custom_call.1} parent=5 // pred_region
        %s1300 = ssub.s32 %s13, 2
        // Predicated region
        $region41: #{tpu_custom_call.1} parent=39 // pred_check
          %p1301 = pneg %p110
        $region42: #{tpu_custom_call.1} parent=39 // pred_check_branch
          %1303 = sbr.rel (%p1301) target = $region44
        $region43: #{tpu_custom_call.1} parent=39 // pred_region
          %s1304 = sand.u32 %s95, 1
          %s1305 = scalar_lea.sflag [#allocation4], %s1304
          %s1306 = sand.u32 %s95, 1
          %s1307 = smul.addr %s1306, 10
          %s1308 = scalar_lea.vmem [#allocation3], %s1307
          %1309 = dma.done %s1305, 160
        $region44: #{tpu_custom_call.1} parent=39 // pred_fallthru
          _
      $region40: #{tpu_custom_call.1} parent=5 // pred_fallthru
        _
    $region6: #{tpu_custom_call.1} parent=1 // loop_footer
      %s17 = sadd.s32 1, %s13
    $region7: #{tpu_custom_call.1} parent=1 // loop_footer_branch
      %12 = sbr.rel target = $region3
    $region8: #{tpu_custom_call.1} parent=1 // loop_exit
      _
    %1310 = vsyncpa [#allocation4], 1
    %s1311 = scalar_lea.sflag [#allocation4], 1
    %1312 = vsyncpa %s1311, 1

</llo_original>
